<compile_context>
chip_gen: v5e
topology: v5e:2x2
jax: 0.10.0
libtpu: 0.0.40
codegen_flags: <defaults>
</compile_context>

<pallas_src>
import jax
import jax.numpy as jnp
from jax.experimental import pallas as pl
from jax.experimental.pallas import tpu as pltpu


def _silu_f32(v):
    # v is f32. exp and the reciprocal both go to the EUP slot; keeps the
    # VALU slots free for the adds/muls.
    e = jnp.exp(-v)
    return v * pl.reciprocal(1.0 + e, approx=True)


def mlp_kernel(x_ref,
               w_in_ref, b_in_ref,
               wh_ref, bh_ref,
               wo1h_ref, wo1x_ref, bo1_ref,
               wout_ref, bout_ref,
               out_ref):
    # bf16 activations/weights on the MXU, f32 accumulation, f32 SiLU/bias math.
    x = x_ref[...]                                        # (tile_b, n_in) bf16

    # in_to_hidden + SiLU
    h = _silu_f32(
        jnp.dot(x, w_in_ref[...], preferred_element_type=jnp.float32)
        + b_in_ref[...])

    # hidden_to_hidden (n_layers - 1) + SiLU, statically unrolled
    n_hidden = wh_ref.shape[0]
    for l in range(n_hidden):
        h = _silu_f32(
            jnp.dot(h.astype(jnp.bfloat16), wh_ref[l],
                    preferred_element_type=jnp.float32)
            + bh_ref[l])

    # hidden_to_out1 on cat((h, x), -1), expressed as split matmuls.
    # x is re-read from VMEM here (cheap vld) instead of keeping the top-of-
    # kernel load live across all layers -> lower vreg pressure at big tiles.
    h = (jnp.dot(h.astype(jnp.bfloat16), wo1h_ref[...],
                 preferred_element_type=jnp.float32)
         + jnp.dot(x_ref[...], wo1x_ref[...],
                   preferred_element_type=jnp.float32)
         + bo1_ref[...])

    # out1_to_out(SiLU(h))
    o = (jnp.dot(_silu_f32(h).astype(jnp.bfloat16), wout_ref[...],
                 preferred_element_type=jnp.float32)
         + bout_ref[...])

    out_ref[...] = o.astype(out_ref.dtype)
    # TODO(synk): output='softplus' branch not exercised (module default is 'none').


def init_params(key, n_in, n_out, n_nodes=128, n_layers=5):
    """Deterministic params; weights stored PyTorch-style (out_f, in_f)."""
    keys = jax.random.split(key, 2 * (n_layers + 2))
    k = iter(keys)

    def linear(in_f, out_f):
        bound = 1.0 / jnp.sqrt(in_f)
        w = jax.random.uniform(next(k), (out_f, in_f), jnp.float32, -bound, bound)
        b = jax.random.uniform(next(k), (out_f,), jnp.float32, -bound, bound)
        return w, b

    params = {}
    params["in_to_hidden"] = linear(n_in, n_nodes)
    params["hidden_to_hidden"] = [linear(n_nodes, n_nodes) for _ in range(n_layers - 1)]
    params["hidden_to_out1"] = linear(n_nodes + n_in, n_nodes)
    params["out1_to_out"] = linear(n_nodes, n_out)
    return params


def _pick_tile(B):
    # Whole batch in one grid step when it fits comfortably; otherwise the
    # largest power-of-two tile (<=256) dividing B so the MXU sees full tiles
    # and (on v7x) multiple "parallel" steps shard across the two TCs.
    if B <= 256:
        return B
    for t in (256, 128, 64, 32, 16, 8):
        if B % t == 0:
            return t
    return B


@jax.jit
def net_forward(x, params):
    B, n_in = x.shape
    w_in, b_in = params["in_to_hidden"]
    hid = params["hidden_to_hidden"]
    w_o1, b_o1 = params["hidden_to_out1"]
    w_out, b_out = params["out1_to_out"]
    n_nodes = w_in.shape[0]
    n_out = w_out.shape[0]
    n_hidden = len(hid)

    tile_b = _pick_tile(B)
    assert B % tile_b == 0
    grid = (B // tile_b,)

    bf16 = jnp.bfloat16
    # bf16 weights/activations for the MXU; biases stay f32 (added post-accum).
    x_bf = x.astype(bf16)
    w_in_t = w_in.T.astype(bf16)                                   # (n_in, n_nodes)
    b_in_r = b_in.reshape(1, -1)
    wh = jnp.stack([w.T for (w, _) in hid]).astype(bf16)           # (L, n_nodes, n_nodes)
    bh = jnp.stack([b.reshape(1, -1) for (_, b) in hid])           # (L, 1, n_nodes)
    # split cat(h, x) weight: first n_nodes columns act on h, last n_in on x
    w_o1h = w_o1[:, :n_nodes].T.astype(bf16)                       # (n_nodes, n_nodes)
    w_o1x = w_o1[:, n_nodes:].T.astype(bf16)                       # (n_in, n_nodes)
    b_o1_r = b_o1.reshape(1, -1)
    w_out_t = w_out.T.astype(bf16)                                 # (n_nodes, n_out)
    b_out_r = b_out.reshape(1, -1)

    def resident(shape):
        # Constant index_map: block index never changes across grid steps, so
        # Pallas does not re-DMA these weights per step.
        zeros = (0,) * len(shape)
        return pl.BlockSpec(shape, lambda i: zeros)

    in_specs = [
        pl.BlockSpec((tile_b, n_in), lambda i: (i, 0)),            # x
        resident((n_in, n_nodes)), resident((1, n_nodes)),         # in_to_hidden
        resident((n_hidden, n_nodes, n_nodes)),                    # stacked hidden W
        resident((n_hidden, 1, n_nodes)),                          # stacked hidden b
        resident((n_nodes, n_nodes)),                              # w_o1h
        resident((n_in, n_nodes)),                                 # w_o1x
        resident((1, n_nodes)),                                    # b_o1
        resident((n_nodes, n_out)),                                # w_out
        resident((1, n_out)),                                      # b_out
    ]

    # Advisory cost estimate so XLA schedules around this call sensibly.
    flops = 2 * B * (n_in * n_nodes
                     + n_hidden * n_nodes * n_nodes
                     + n_nodes * n_nodes + n_in * n_nodes
                     + n_nodes * n_out)
    transcendentals = 2 * (n_hidden + 2) * B * n_nodes             # exp + recip per SiLU
    weight_bytes = 2 * (n_in * n_nodes + n_hidden * n_nodes * n_nodes
                        + n_nodes * n_nodes + n_in * n_nodes + n_nodes * n_out)
    bias_bytes = 4 * ((n_hidden + 3) * n_nodes + n_out)
    bytes_accessed = weight_bytes + bias_bytes + 2 * B * n_in + 4 * B * n_out

    return pl.pallas_call(
        mlp_kernel,
        out_shape=jax.ShapeDtypeStruct((B, n_out), jnp.float32),
        grid_spec=pltpu.PrefetchScalarGridSpec(
            num_scalar_prefetch=0,
            grid=grid,
            in_specs=in_specs,
            out_specs=pl.BlockSpec((tile_b, n_out), lambda i: (i, 0)),
        ),
        compiler_params=pltpu.CompilerParams(
            dimension_semantics=("parallel",)),
        cost_estimate=pl.CostEstimate(
            flops=flops,
            transcendentals=transcendentals,
            bytes_accessed=bytes_accessed),
    )(x_bf, w_in_t, b_in_r, wh, bh, w_o1h, w_o1x, b_o1_r, w_out_t, b_out_r)


def net_forward_ref(x, params):
    """Plain f32 JAX reference mirroring the PyTorch forward."""
    w_in, b_in = params["in_to_hidden"]
    h = jax.nn.silu(x @ w_in.T + b_in)
    for w, b in params["hidden_to_hidden"]:
        h = jax.nn.silu(h @ w.T + b)
    h = jnp.concatenate([h, x], axis=-1)
    w_o1, b_o1 = params["hidden_to_out1"]
    h = h @ w_o1.T + b_o1
    w_out, b_out = params["out1_to_out"]
    return jax.nn.silu(h) @ w_out.T + b_out


def net_forward_ref_bf16(x, params):
    """Reference with the same bf16 weight/activation rounding as the kernel."""
    bf16, f32 = jnp.bfloat16, jnp.float32

    def lin(a, w, b):
        return jnp.dot(a.astype(bf16), w.T.astype(bf16),
                       preferred_element_type=f32) + b

    w_in, b_in = params["in_to_hidden"]
    h = jax.nn.silu(lin(x, w_in, b_in))
    n_nodes = h.shape[-1]
    for w, b in params["hidden_to_hidden"]:
        h = jax.nn.silu(lin(h, w, b))
    w_o1, b_o1 = params["hidden_to_out1"]
    h = (jnp.dot(h.astype(bf16), w_o1[:, :n_nodes].T.astype(bf16),
                 preferred_element_type=f32)
         + jnp.dot(x.astype(bf16), w_o1[:, n_nodes:].T.astype(bf16),
                   preferred_element_type=f32)
         + b_o1)
    w_out, b_out = params["out1_to_out"]
    return jnp.dot(jax.nn.silu(h).astype(bf16), w_out.T.astype(bf16),
                   preferred_element_type=f32) + b_out


if __name__ == "__main__":
    n_in, n_out, n_nodes, n_layers = 32, 8, 128, 5
    batch = 16

    key = jax.random.PRNGKey(0)
    kp, kx = jax.random.split(key)
    params = init_params(kp, n_in, n_out, n_nodes, n_layers)
    x = jax.random.normal(kx, (batch, n_in), jnp.float32)

    out = jax.block_until_ready(net_forward(x, params))

    ref_bf = net_forward_ref_bf16(x, params)
    ref_f32 = net_forward_ref(x, params)
    assert out.shape == (batch, n_out)
    assert jnp.allclose(out, ref_bf, atol=2e-2, rtol=2e-2), "mismatch vs bf16 reference"
    assert jnp.allclose(out, ref_f32, atol=1e-1, rtol=1e-1), "mismatch vs f32 reference"

    print("KERNEL_OK")
</pallas_src>

<mosaic_0001>
module attributes {stable_mosaic.version = 11 : i64} {
  func.func @mlp_kernel(%arg0: i32, %arg1: memref<16x32xbf16, #tpu.memory_space<vmem>>, %arg2: memref<32x128xbf16, #tpu.memory_space<vmem>>, %arg3: memref<1x128xf32, #tpu.memory_space<vmem>>, %arg4: memref<4x128x128xbf16, #tpu.memory_space<vmem>>, %arg5: memref<4x1x128xf32, #tpu.memory_space<vmem>>, %arg6: memref<128x128xbf16, #tpu.memory_space<vmem>>, %arg7: memref<32x128xbf16, #tpu.memory_space<vmem>>, %arg8: memref<1x128xf32, #tpu.memory_space<vmem>>, %arg9: memref<128x8xbf16, #tpu.memory_space<vmem>>, %arg10: memref<1x8xf32, #tpu.memory_space<vmem>>, %arg11: memref<16x8xf32, #tpu.memory_space<vmem>>) attributes {dimension_semantics = [#tpu.dimension_semantics<parallel>], iteration_bounds = array<i64: 1>, scalar_prefetch = 0 : i64, scratch_operands = 0 : i64, tpu.core_type = #tpu.core_type<tc>, window_params = [{transform_indices = @transform_0, window_bounds = array<i64: 16, 32>}, {pipeline_mode = #tpu.pipeline_mode<synchronous>, transform_indices = @transform_1, window_bounds = array<i64: 32, 128>}, {pipeline_mode = #tpu.pipeline_mode<synchronous>, transform_indices = @transform_2, window_bounds = array<i64: 1, 128>}, {pipeline_mode = #tpu.pipeline_mode<synchronous>, transform_indices = @transform_3, window_bounds = array<i64: 4, 128, 128>}, {pipeline_mode = #tpu.pipeline_mode<synchronous>, transform_indices = @transform_4, window_bounds = array<i64: 4, 1, 128>}, {pipeline_mode = #tpu.pipeline_mode<synchronous>, transform_indices = @transform_5, window_bounds = array<i64: 128, 128>}, {pipeline_mode = #tpu.pipeline_mode<synchronous>, transform_indices = @transform_6, window_bounds = array<i64: 32, 128>}, {pipeline_mode = #tpu.pipeline_mode<synchronous>, transform_indices = @transform_7, window_bounds = array<i64: 1, 128>}, {pipeline_mode = #tpu.pipeline_mode<synchronous>, transform_indices = @transform_8, window_bounds = array<i64: 128, 8>}, {pipeline_mode = #tpu.pipeline_mode<synchronous>, transform_indices = @transform_9, window_bounds = array<i64: 1, 8>}, {transform_indices = @transform_10, window_bounds = array<i64: 16, 8>}]} {
    %c0 = arith.constant 0 : index
    %c0_0 = arith.constant 0 : index
    %0 = vector.load %arg1[%c0, %c0_0] : memref<16x32xbf16, #tpu.memory_space<vmem>>, vector<16x32xbf16>
    %c0_1 = arith.constant 0 : index
    %c0_2 = arith.constant 0 : index
    %1 = vector.load %arg2[%c0_1, %c0_2] : memref<32x128xbf16, #tpu.memory_space<vmem>>, vector<32x128xbf16>
    %cst = arith.constant dense<0.000000e+00> : vector<16x128xf32>
    %2 = tpu.matmul %0, %1, %cst {dimension_numbers = #tpu.dot_dimension_numbers<[1], [0], [0], [1], [0, 0, 1, 1], [], []>} : vector<16x32xbf16>, vector<32x128xbf16>, vector<16x128xf32> -> vector<16x128xf32>
    %c0_3 = arith.constant 0 : index
    %c0_4 = arith.constant 0 : index
    %3 = vector.load %arg3[%c0_3, %c0_4] : memref<1x128xf32, #tpu.memory_space<vmem>>, vector<1x128xf32>
    %4 = vector.broadcast %3 : vector<1x128xf32> to vector<16x128xf32>
    %5 = arith.addf %2, %4 : vector<16x128xf32>
    %cst_5 = arith.constant 0.000000e+00 : f32
    %6 = vector.broadcast %cst_5 : f32 to vector<16x128xf32>
    %7 = arith.subf %6, %5 : vector<16x128xf32>
    %8 = math.exp %7 : vector<16x128xf32>
    %cst_6 = arith.constant 1.000000e+00 : f32
    %9 = vector.broadcast %cst_6 : f32 to vector<16x128xf32>
    %10 = arith.addf %9, %8 : vector<16x128xf32>
    %11 = tpu.reciprocal %10 {approx = true} : vector<16x128xf32> -> vector<16x128xf32>
    %12 = arith.mulf %5, %11 : vector<16x128xf32>
    %13 = arith.truncf %12 : vector<16x128xf32> to vector<16x128xbf16>
    %c0_7 = arith.constant 0 : index
    %c0_8 = arith.constant 0 : index
    %c0_9 = arith.constant 0 : index
    %14 = vector.load %arg4[%c0_7, %c0_8, %c0_9] : memref<4x128x128xbf16, #tpu.memory_space<vmem>>, vector<1x128x128xbf16>
    %15 = vector.shape_cast %14 : vector<1x128x128xbf16> to vector<128x128xbf16>
    %cst_10 = arith.constant dense<0.000000e+00> : vector<16x128xf32>
    %16 = tpu.matmul %13, %15, %cst_10 {dimension_numbers = #tpu.dot_dimension_numbers<[1], [0], [0], [1], [0, 0, 1, 1], [], []>} : vector<16x128xbf16>, vector<128x128xbf16>, vector<16x128xf32> -> vector<16x128xf32>
    %c0_11 = arith.constant 0 : index
    %c0_12 = arith.constant 0 : index
    %c0_13 = arith.constant 0 : index
    %17 = vector.load %arg5[%c0_11, %c0_12, %c0_13] : memref<4x1x128xf32, #tpu.memory_space<vmem>>, vector<1x1x128xf32>
    %18 = vector.shape_cast %17 : vector<1x1x128xf32> to vector<1x128xf32>
    %19 = vector.broadcast %18 : vector<1x128xf32> to vector<16x128xf32>
    %20 = arith.addf %16, %19 : vector<16x128xf32>
    %cst_14 = arith.constant 0.000000e+00 : f32
    %21 = vector.broadcast %cst_14 : f32 to vector<16x128xf32>
    %22 = arith.subf %21, %20 : vector<16x128xf32>
    %23 = math.exp %22 : vector<16x128xf32>
    %cst_15 = arith.constant 1.000000e+00 : f32
    %24 = vector.broadcast %cst_15 : f32 to vector<16x128xf32>
    %25 = arith.addf %24, %23 : vector<16x128xf32>
    %26 = tpu.reciprocal %25 {approx = true} : vector<16x128xf32> -> vector<16x128xf32>
    %27 = arith.mulf %20, %26 : vector<16x128xf32>
    %28 = arith.truncf %27 : vector<16x128xf32> to vector<16x128xbf16>
    %c1 = arith.constant 1 : index
    %c0_16 = arith.constant 0 : index
    %c0_17 = arith.constant 0 : index
    %29 = vector.load %arg4[%c1, %c0_16, %c0_17] : memref<4x128x128xbf16, #tpu.memory_space<vmem>>, vector<1x128x128xbf16>
    %30 = vector.shape_cast %29 : vector<1x128x128xbf16> to vector<128x128xbf16>
    %cst_18 = arith.constant dense<0.000000e+00> : vector<16x128xf32>
    %31 = tpu.matmul %28, %30, %cst_18 {dimension_numbers = #tpu.dot_dimension_numbers<[1], [0], [0], [1], [0, 0, 1, 1], [], []>} : vector<16x128xbf16>, vector<128x128xbf16>, vector<16x128xf32> -> vector<16x128xf32>
    %c1_19 = arith.constant 1 : index
    %c0_20 = arith.constant 0 : index
    %c0_21 = arith.constant 0 : index
    %32 = vector.load %arg5[%c1_19, %c0_20, %c0_21] : memref<4x1x128xf32, #tpu.memory_space<vmem>>, vector<1x1x128xf32>
    %33 = vector.shape_cast %32 : vector<1x1x128xf32> to vector<1x128xf32>
    %34 = vector.broadcast %33 : vector<1x128xf32> to vector<16x128xf32>
    %35 = arith.addf %31, %34 : vector<16x128xf32>
    %cst_22 = arith.constant 0.000000e+00 : f32
    %36 = vector.broadcast %cst_22 : f32 to vector<16x128xf32>
    %37 = arith.subf %36, %35 : vector<16x128xf32>
    %38 = math.exp %37 : vector<16x128xf32>
    %cst_23 = arith.constant 1.000000e+00 : f32
    %39 = vector.broadcast %cst_23 : f32 to vector<16x128xf32>
    %40 = arith.addf %39, %38 : vector<16x128xf32>
    %41 = tpu.reciprocal %40 {approx = true} : vector<16x128xf32> -> vector<16x128xf32>
    %42 = arith.mulf %35, %41 : vector<16x128xf32>
    %43 = arith.truncf %42 : vector<16x128xf32> to vector<16x128xbf16>
    %c2 = arith.constant 2 : index
    %c0_24 = arith.constant 0 : index
    %c0_25 = arith.constant 0 : index
    %44 = vector.load %arg4[%c2, %c0_24, %c0_25] : memref<4x128x128xbf16, #tpu.memory_space<vmem>>, vector<1x128x128xbf16>
    %45 = vector.shape_cast %44 : vector<1x128x128xbf16> to vector<128x128xbf16>
    %cst_26 = arith.constant dense<0.000000e+00> : vector<16x128xf32>
    %46 = tpu.matmul %43, %45, %cst_26 {dimension_numbers = #tpu.dot_dimension_numbers<[1], [0], [0], [1], [0, 0, 1, 1], [], []>} : vector<16x128xbf16>, vector<128x128xbf16>, vector<16x128xf32> -> vector<16x128xf32>
    %c2_27 = arith.constant 2 : index
    %c0_28 = arith.constant 0 : index
    %c0_29 = arith.constant 0 : index
    %47 = vector.load %arg5[%c2_27, %c0_28, %c0_29] : memref<4x1x128xf32, #tpu.memory_space<vmem>>, vector<1x1x128xf32>
    %48 = vector.shape_cast %47 : vector<1x1x128xf32> to vector<1x128xf32>
    %49 = vector.broadcast %48 : vector<1x128xf32> to vector<16x128xf32>
    %50 = arith.addf %46, %49 : vector<16x128xf32>
    %cst_30 = arith.constant 0.000000e+00 : f32
    %51 = vector.broadcast %cst_30 : f32 to vector<16x128xf32>
    %52 = arith.subf %51, %50 : vector<16x128xf32>
    %53 = math.exp %52 : vector<16x128xf32>
    %cst_31 = arith.constant 1.000000e+00 : f32
    %54 = vector.broadcast %cst_31 : f32 to vector<16x128xf32>
    %55 = arith.addf %54, %53 : vector<16x128xf32>
    %56 = tpu.reciprocal %55 {approx = true} : vector<16x128xf32> -> vector<16x128xf32>
    %57 = arith.mulf %50, %56 : vector<16x128xf32>
    %58 = arith.truncf %57 : vector<16x128xf32> to vector<16x128xbf16>
    %c3 = arith.constant 3 : index
    %c0_32 = arith.constant 0 : index
    %c0_33 = arith.constant 0 : index
    %59 = vector.load %arg4[%c3, %c0_32, %c0_33] : memref<4x128x128xbf16, #tpu.memory_space<vmem>>, vector<1x128x128xbf16>
    %60 = vector.shape_cast %59 : vector<1x128x128xbf16> to vector<128x128xbf16>
    %cst_34 = arith.constant dense<0.000000e+00> : vector<16x128xf32>
    %61 = tpu.matmul %58, %60, %cst_34 {dimension_numbers = #tpu.dot_dimension_numbers<[1], [0], [0], [1], [0, 0, 1, 1], [], []>} : vector<16x128xbf16>, vector<128x128xbf16>, vector<16x128xf32> -> vector<16x128xf32>
    %c3_35 = arith.constant 3 : index
    %c0_36 = arith.constant 0 : index
    %c0_37 = arith.constant 0 : index
    %62 = vector.load %arg5[%c3_35, %c0_36, %c0_37] : memref<4x1x128xf32, #tpu.memory_space<vmem>>, vector<1x1x128xf32>
    %63 = vector.shape_cast %62 : vector<1x1x128xf32> to vector<1x128xf32>
    %64 = vector.broadcast %63 : vector<1x128xf32> to vector<16x128xf32>
    %65 = arith.addf %61, %64 : vector<16x128xf32>
    %cst_38 = arith.constant 0.000000e+00 : f32
    %66 = vector.broadcast %cst_38 : f32 to vector<16x128xf32>
    %67 = arith.subf %66, %65 : vector<16x128xf32>
    %68 = math.exp %67 : vector<16x128xf32>
    %cst_39 = arith.constant 1.000000e+00 : f32
    %69 = vector.broadcast %cst_39 : f32 to vector<16x128xf32>
    %70 = arith.addf %69, %68 : vector<16x128xf32>
    %71 = tpu.reciprocal %70 {approx = true} : vector<16x128xf32> -> vector<16x128xf32>
    %72 = arith.mulf %65, %71 : vector<16x128xf32>
    %73 = arith.truncf %72 : vector<16x128xf32> to vector<16x128xbf16>
    %c0_40 = arith.constant 0 : index
    %c0_41 = arith.constant 0 : index
    %74 = vector.load %arg6[%c0_40, %c0_41] : memref<128x128xbf16, #tpu.memory_space<vmem>>, vector<128x128xbf16>
    %cst_42 = arith.constant dense<0.000000e+00> : vector<16x128xf32>
    %75 = tpu.matmul %73, %74, %cst_42 {dimension_numbers = #tpu.dot_dimension_numbers<[1], [0], [0], [1], [0, 0, 1, 1], [], []>} : vector<16x128xbf16>, vector<128x128xbf16>, vector<16x128xf32> -> vector<16x128xf32>
    %c0_43 = arith.constant 0 : index
    %c0_44 = arith.constant 0 : index
    %76 = vector.load %arg1[%c0_43, %c0_44] : memref<16x32xbf16, #tpu.memory_space<vmem>>, vector<16x32xbf16>
    %c0_45 = arith.constant 0 : index
    %c0_46 = arith.constant 0 : index
    %77 = vector.load %arg7[%c0_45, %c0_46] : memref<32x128xbf16, #tpu.memory_space<vmem>>, vector<32x128xbf16>
    %cst_47 = arith.constant dense<0.000000e+00> : vector<16x128xf32>
    %78 = tpu.matmul %76, %77, %cst_47 {dimension_numbers = #tpu.dot_dimension_numbers<[1], [0], [0], [1], [0, 0, 1, 1], [], []>} : vector<16x32xbf16>, vector<32x128xbf16>, vector<16x128xf32> -> vector<16x128xf32>
    %79 = arith.addf %75, %78 : vector<16x128xf32>
    %c0_48 = arith.constant 0 : index
    %c0_49 = arith.constant 0 : index
    %80 = vector.load %arg8[%c0_48, %c0_49] : memref<1x128xf32, #tpu.memory_space<vmem>>, vector<1x128xf32>
    %81 = vector.broadcast %80 : vector<1x128xf32> to vector<16x128xf32>
    %82 = arith.addf %79, %81 : vector<16x128xf32>
    %cst_50 = arith.constant 0.000000e+00 : f32
    %83 = vector.broadcast %cst_50 : f32 to vector<16x128xf32>
    %84 = arith.subf %83, %82 : vector<16x128xf32>
    %85 = math.exp %84 : vector<16x128xf32>
    %cst_51 = arith.constant 1.000000e+00 : f32
    %86 = vector.broadcast %cst_51 : f32 to vector<16x128xf32>
    %87 = arith.addf %86, %85 : vector<16x128xf32>
    %88 = tpu.reciprocal %87 {approx = true} : vector<16x128xf32> -> vector<16x128xf32>
    %89 = arith.mulf %82, %88 : vector<16x128xf32>
    %90 = arith.truncf %89 : vector<16x128xf32> to vector<16x128xbf16>
    %c0_52 = arith.constant 0 : index
    %c0_53 = arith.constant 0 : index
    %91 = vector.load %arg9[%c0_52, %c0_53] : memref<128x8xbf16, #tpu.memory_space<vmem>>, vector<128x8xbf16>
    %cst_54 = arith.constant dense<0.000000e+00> : vector<16x8xf32>
    %92 = tpu.matmul %90, %91, %cst_54 {dimension_numbers = #tpu.dot_dimension_numbers<[1], [0], [0], [1], [0, 0, 1, 1], [], []>} : vector<16x128xbf16>, vector<128x8xbf16>, vector<16x8xf32> -> vector<16x8xf32>
    %c0_55 = arith.constant 0 : index
    %c0_56 = arith.constant 0 : index
    %93 = vector.load %arg10[%c0_55, %c0_56] : memref<1x8xf32, #tpu.memory_space<vmem>>, vector<1x8xf32>
    %94 = vector.broadcast %93 : vector<1x8xf32> to vector<16x8xf32>
    %95 = arith.addf %92, %94 : vector<16x8xf32>
    %c0_57 = arith.constant 0 : index
    %c0_58 = arith.constant 0 : index
    %96 = vector.load %arg11[%c0_57, %c0_58] : memref<16x8xf32, #tpu.memory_space<vmem>>, vector<16x8xf32>
    tpu.vector_store %arg11[%c0_57, %c0_58], %95 {strides = array<i32>} : memref<16x8xf32, #tpu.memory_space<vmem>>, vector<16x8xf32>,
    return
  }
  func.func @transform_0(%arg0: i32) -> (i32, i32) {
    %c0_i32 = arith.constant 0 : i32
    %c0_i32_0 = arith.constant 0 : i32
    return %arg0, %c0_i32 : i32, i32
  }
  func.func @transform_1(%arg0: i32) -> (i32, i32) {
    %c0_i32 = arith.constant 0 : i32
    %c0_i32_0 = arith.constant 0 : i32
    %c0_i32_1 = arith.constant 0 : i32
    return %c0_i32, %c0_i32_0 : i32, i32
  }
  func.func @transform_2(%arg0: i32) -> (i32, i32) {
    %c0_i32 = arith.constant 0 : i32
    %c0_i32_0 = arith.constant 0 : i32
    %c0_i32_1 = arith.constant 0 : i32
    return %c0_i32, %c0_i32_0 : i32, i32
  }
  func.func @transform_3(%arg0: i32) -> (i32, i32, i32) {
    %c0_i32 = arith.constant 0 : i32
    %c0_i32_0 = arith.constant 0 : i32
    %c0_i32_1 = arith.constant 0 : i32
    %c0_i32_2 = arith.constant 0 : i32
    return %c0_i32, %c0_i32_0, %c0_i32_1 : i32, i32, i32
  }
  func.func @transform_4(%arg0: i32) -> (i32, i32, i32) {
    %c0_i32 = arith.constant 0 : i32
    %c0_i32_0 = arith.constant 0 : i32
    %c0_i32_1 = arith.constant 0 : i32
    %c0_i32_2 = arith.constant 0 : i32
    return %c0_i32, %c0_i32_0, %c0_i32_1 : i32, i32, i32
  }
  func.func @transform_5(%arg0: i32) -> (i32, i32) {
    %c0_i32 = arith.constant 0 : i32
    %c0_i32_0 = arith.constant 0 : i32
    %c0_i32_1 = arith.constant 0 : i32
    return %c0_i32, %c0_i32_0 : i32, i32
  }
  func.func @transform_6(%arg0: i32) -> (i32, i32) {
    %c0_i32 = arith.constant 0 : i32
    %c0_i32_0 = arith.constant 0 : i32
    %c0_i32_1 = arith.constant 0 : i32
    return %c0_i32, %c0_i32_0 : i32, i32
  }
  func.func @transform_7(%arg0: i32) -> (i32, i32) {
    %c0_i32 = arith.constant 0 : i32
    %c0_i32_0 = arith.constant 0 : i32
    %c0_i32_1 = arith.constant 0 : i32
    return %c0_i32, %c0_i32_0 : i32, i32
  }
  func.func @transform_8(%arg0: i32) -> (i32, i32) {
    %c0_i32 = arith.constant 0 : i32
    %c0_i32_0 = arith.constant 0 : i32
    %c0_i32_1 = arith.constant 0 : i32
    return %c0_i32, %c0_i32_0 : i32, i32
  }
  func.func @transform_9(%arg0: i32) -> (i32, i32) {
    %c0_i32 = arith.constant 0 : i32
    %c0_i32_0 = arith.constant 0 : i32
    %c0_i32_1 = arith.constant 0 : i32
    return %c0_i32, %c0_i32_0 : i32, i32
  }
  func.func @transform_10(%arg0: i32) -> (i32, i32) {
    %c0_i32 = arith.constant 0 : i32
    %c0_i32_0 = arith.constant 0 : i32
    return %arg0, %c0_i32 : i32, i32
  }
}

</mosaic_0001>

<llo_original>
// kernel: net_forward.1
$region0: #{net_forward.1}
  #allocation0 [shape = 'u32[]', space=smem, size = 0x4, offset = 0x4, fixed_abs, tag = 'smem constant byte address 0x4 - core index']
  #allocation1 [shape = 'u32[72,128]{1,0:T(1,128)}', space=vmem, size = 0x9000, scoped, tag = 'internal scratch']
  %s0 = inlined_call_operand.vmem [shape: bf16[16,32], index: 0, kind: input, shape index: {}]
  %s1 = inlined_call_operand.vmem [shape: bf16[32,128], index: 1, kind: input, shape index: {}]
  %s2 = inlined_call_operand.vmem [shape: f32[1,128], index: 2, kind: input, shape index: {}]
  %s3 = inlined_call_operand.vmem [shape: bf16[4,128,128], index: 3, kind: input, shape index: {}]
  %s4 = inlined_call_operand.vmem [shape: f32[4,1,128], index: 4, kind: input, shape index: {}]
  %s5 = inlined_call_operand.vmem [shape: bf16[128,128], index: 5, kind: input, shape index: {}]
  %s6 = inlined_call_operand.vmem [shape: bf16[32,128], index: 6, kind: input, shape index: {}]
  %s7 = inlined_call_operand.vmem [shape: f32[1,128], index: 7, kind: input, shape index: {}]
  %s8 = inlined_call_operand.vmem [shape: bf16[128,8], index: 8, kind: input, shape index: {}]
  %s9 = inlined_call_operand.vmem [shape: f32[1,8], index: 9, kind: input, shape index: {}]
  %s10 = inlined_call_operand.vmem [shape: f32[16,8], index: 10, kind: output, shape index: {}]
  %s11 = sld [smem:[#allocation0]]
  $region50: #{net_forward.1} parent=0
    _
  %s13 = ssub.s32 1, %s11
  %s14 = scalar_select 0, %s13, %s11
  // Predicated region
  $region2: #{net_forward.1} parent=0 // pred_check
    _
  $region3: #{net_forward.1} parent=0 // pred_check_branch
    %16 = sbr.rel (0) target = $region5
  $region4: #{net_forward.1} parent=0 // pred_region
    _
  $region5: #{net_forward.1} parent=0 // pred_fallthru
    _
  // Predicated region
  $region6: #{net_forward.1} parent=0 // pred_check
    _
  $region7: #{net_forward.1} parent=0 // pred_check_branch
    %18 = sbr.rel (0) target = $region9
  $region8: #{net_forward.1} parent=0 // pred_region
    _
  $region9: #{net_forward.1} parent=0 // pred_fallthru
    _
  // Predicated region
  $region10: #{net_forward.1} parent=0 // pred_check
    _
  $region11: #{net_forward.1} parent=0 // pred_check_branch
    %20 = sbr.rel (0) target = $region13
  $region12: #{net_forward.1} parent=0 // pred_region
    _
  $region13: #{net_forward.1} parent=0 // pred_fallthru
    _
  // Predicated region
  $region14: #{net_forward.1} parent=0 // pred_check
    _
  $region15: #{net_forward.1} parent=0 // pred_check_branch
    %22 = sbr.rel (0) target = $region17
  $region16: #{net_forward.1} parent=0 // pred_region
    _
  $region17: #{net_forward.1} parent=0 // pred_fallthru
    _
  // Predicated region
  $region18: #{net_forward.1} parent=0 // pred_check
    _
  $region19: #{net_forward.1} parent=0 // pred_check_branch
    %24 = sbr.rel (0) target = $region21
  $region20: #{net_forward.1} parent=0 // pred_region
    _
  $region21: #{net_forward.1} parent=0 // pred_fallthru
    _
  // Predicated region
  $region22: #{net_forward.1} parent=0 // pred_check
    _
  $region23: #{net_forward.1} parent=0 // pred_check_branch
    %26 = sbr.rel (0) target = $region25
  $region24: #{net_forward.1} parent=0 // pred_region
    _
  $region25: #{net_forward.1} parent=0 // pred_fallthru
    _
  // Predicated region
  $region26: #{net_forward.1} parent=0 // pred_check
    _
  $region27: #{net_forward.1} parent=0 // pred_check_branch
    %28 = sbr.rel (0) target = $region29
  $region28: #{net_forward.1} parent=0 // pred_region
    _
  $region29: #{net_forward.1} parent=0 // pred_fallthru
    _
  // Predicated region
  $region30: #{net_forward.1} parent=0 // pred_check
    _
  $region31: #{net_forward.1} parent=0 // pred_check_branch
    %30 = sbr.rel (0) target = $region33
  $region32: #{net_forward.1} parent=0 // pred_region
    _
  $region33: #{net_forward.1} parent=0 // pred_fallthru
    _
  // Predicated region
  $region34: #{net_forward.1} parent=0 // pred_check
    _
  $region35: #{net_forward.1} parent=0 // pred_check_branch
    %32 = sbr.rel (0) target = $region37
  $region36: #{net_forward.1} parent=0 // pred_region
    _
  $region37: #{net_forward.1} parent=0 // pred_fallthru
    _
  // Predicated region
  $region38: #{net_forward.1} parent=0 // pred_check
    _
  $region39: #{net_forward.1} parent=0 // pred_check_branch
    %34 = sbr.rel (0) target = $region41
  $region40: #{net_forward.1} parent=0 // pred_region
    _
  $region41: #{net_forward.1} parent=0 // pred_fallthru
    _
  %v36 = vld [vmem:[%s0] sm:$0xf]
  %v37 = vld [vmem:[%s0 + $0x4] sm:$0xf]
  %v38 = vld [vmem:[%s1] sm:$0xf]
  %v39 = vld [vmem:[%s1 + $0x4] sm:$0xf]
  %v40 = vld [vmem:[%s1 + $0x8] sm:$0xf]
  %v41 = vld [vmem:[%s1 + $0xc] sm:$0xf]
  %v42 = vld [vmem:[%s2] sm:$0x1]
  %v44 = vperm.slane %v42, 0
  %v48 = vunpack.c.l.b16 %v36
  %v49 = vunpack.c.l.b16 %v37
  %v50 = vpack.c.b16 %v49, %v48
  %v55 = vunpack.c.l.b16 %v38
  %v56 = vunpack.c.l.b16 %v39
  %v57 = vunpack.c.l.b16 %v40
  %v58 = vunpack.c.l.b16 %v41
  %v59 = vpack.c.b16 %v56, %v55
  %v60 = vpack.c.b16 %v58, %v57
  %vm63 = vcmask 261120
  %v65 = vsel %vm63, %v50, 0
  %67 = vmatpush.bf16.msra.mxu0 0
  %68 = vmatpush.bf16.msra.mxu0 0
  %69 = vmatpush.bf16.msra.mxu0 0
  %70 = vmatpush.bf16.msra.mxu0 0
  %71 = vmatpush.bf16.msra.mxu0 0
  %72 = vmatpush.bf16.msra.mxu0 0
  %73 = vmatpush.bf16.msra.mxu0 %v60
  %74 = vmatpush.bf16.msra.mxu0 %v59
  %75 = vmatmul.bf16.gmra.mxu0 %v65
  %v76 = vpop.f32.mrf.mxu0
  %v77 = vadd.f32 %v44, %v76
  %v78 = vpop.f32.mrf.mxu0
  %v79 = vadd.f32 %v44, %v78
  %80 = vdwg.mxu0
  %v81 = vsub.f32 0.0, %v77
  %v82 = vsub.f32 0.0, %v79
  %v83 = vmul.f32 %v81, 1.442695
  %v84 = vpow.pop %v83
  %v85 = vmul.f32 %v82, 1.442695
  %v86 = vpow.pop %v85
  %v87 = vadd.f32 %v84, 1.0
  %v88 = vadd.f32 %v86, 1.0
  %v89 = vrcp.pop %v87
  %v90 = vrcp.pop %v88
  %v91 = vmul.f32 %v77, %v89
  %v92 = vmul.f32 %v79, %v90
  %v93 = vpack.c.bf16 %v92, %v91
  %v94 = vld [vmem:[%s3] sm:$0xf]
  %v95 = vld [vmem:[%s3 + $0x4] sm:$0xf]
  %v96 = vld [vmem:[%s3 + $0x8] sm:$0xf]
  %v97 = vld [vmem:[%s3 + $0xc] sm:$0xf]
  %v98 = vld [vmem:[%s3 + $0x10] sm:$0xf]
  %v99 = vld [vmem:[%s3 + $0x14] sm:$0xf]
  %v100 = vld [vmem:[%s3 + $0x18] sm:$0xf]
  %v101 = vld [vmem:[%s3 + $0x1c] sm:$0xf]
  %v102 = vld [vmem:[%s3 + $0x20] sm:$0xf]
  %v103 = vld [vmem:[%s3 + $0x24] sm:$0xf]
  %v104 = vld [vmem:[%s3 + $0x28] sm:$0xf]
  %v105 = vld [vmem:[%s3 + $0x2c] sm:$0xf]
  %v106 = vld [vmem:[%s3 + $0x30] sm:$0xf]
  %v107 = vld [vmem:[%s3 + $0x34] sm:$0xf]
  %v108 = vld [vmem:[%s3 + $0x38] sm:$0xf]
  %v109 = vld [vmem:[%s3 + $0x3c] sm:$0xf]
  %v110 = vld [vmem:[%s4] sm:$0x1]
  %v112 = vperm.slane %v110, 0
  %v130 = vunpack.c.l.b16 %v94
  %v131 = vunpack.c.l.b16 %v95
  %v132 = vunpack.c.l.b16 %v96
  %v133 = vunpack.c.l.b16 %v97
  %v134 = vunpack.c.l.b16 %v98
  %v135 = vunpack.c.l.b16 %v99
  %v136 = vunpack.c.l.b16 %v100
  %v137 = vunpack.c.l.b16 %v101
  %v138 = vunpack.c.l.b16 %v102
  %v139 = vunpack.c.l.b16 %v103
  %v140 = vunpack.c.l.b16 %v104
  %v141 = vunpack.c.l.b16 %v105
  %v142 = vunpack.c.l.b16 %v106
  %v143 = vunpack.c.l.b16 %v107
  %v144 = vunpack.c.l.b16 %v108
  %v145 = vunpack.c.l.b16 %v109
  %v146 = vpack.c.b16 %v131, %v130
  %v147 = vpack.c.b16 %v133, %v132
  %v148 = vpack.c.b16 %v135, %v134
  %v149 = vpack.c.b16 %v137, %v136
  %v150 = vpack.c.b16 %v139, %v138
  %v151 = vpack.c.b16 %v141, %v140
  %v152 = vpack.c.b16 %v143, %v142
  %v153 = vpack.c.b16 %v145, %v144
  %162 = vmatpush.bf16.msra.mxu0 %v153
  %163 = vmatpush.bf16.msra.mxu0 %v152
  %164 = vmatpush.bf16.msra.mxu0 %v151
  %165 = vmatpush.bf16.msra.mxu0 %v150
  %166 = vmatpush.bf16.msra.mxu0 %v149
  %167 = vmatpush.bf16.msra.mxu0 %v148
  %168 = vmatpush.bf16.msra.mxu0 %v147
  %169 = vmatpush.bf16.msra.mxu0 %v146
  %170 = vmatmul.bf16.gmra.mxu0 %v93
  %v171 = vpop.f32.mrf.mxu0
  %v172 = vadd.f32 %v112, %v171
  %v173 = vpop.f32.mrf.mxu0
  %v174 = vadd.f32 %v112, %v173
  %175 = vdwg.mxu0
  %v176 = vsub.f32 0.0, %v172
  %v177 = vsub.f32 0.0, %v174
  %v178 = vmul.f32 %v176, 1.442695
  %v179 = vpow.pop %v178
  %v180 = vmul.f32 %v177, 1.442695
  %v181 = vpow.pop %v180
  %v182 = vadd.f32 %v179, 1.0
  %v183 = vadd.f32 %v181, 1.0
  %v184 = vrcp.pop %v182
  %v185 = vrcp.pop %v183
  %v186 = vmul.f32 %v172, %v184
  %v187 = vmul.f32 %v174, %v185
  %v188 = vpack.c.bf16 %v187, %v186
  %s189 = scalar_lea.vmem %s3, 64
  %v190 = vld [vmem:[%s189] sm:$0xf]
  %v191 = vld [vmem:[%s189 + $0x4] sm:$0xf]
  %v192 = vld [vmem:[%s189 + $0x8] sm:$0xf]
  %v193 = vld [vmem:[%s189 + $0xc] sm:$0xf]
  %v194 = vld [vmem:[%s189 + $0x10] sm:$0xf]
  %v195 = vld [vmem:[%s189 + $0x14] sm:$0xf]
  %v196 = vld [vmem:[%s189 + $0x18] sm:$0xf]
  %v197 = vld [vmem:[%s189 + $0x1c] sm:$0xf]
  %v198 = vld [vmem:[%s189 + $0x20] sm:$0xf]
  %v199 = vld [vmem:[%s189 + $0x24] sm:$0xf]
  %v200 = vld [vmem:[%s189 + $0x28] sm:$0xf]
  %v201 = vld [vmem:[%s189 + $0x2c] sm:$0xf]
  %v202 = vld [vmem:[%s189 + $0x30] sm:$0xf]
  %v203 = vld [vmem:[%s189 + $0x34] sm:$0xf]
  %v204 = vld [vmem:[%s189 + $0x38] sm:$0xf]
  %v205 = vld [vmem:[%s189 + $0x3c] sm:$0xf]
  %s206 = scalar_lea.vmem %s4, 1
  %v207 = vld [vmem:[%s206] sm:$0x1]
  %v209 = vperm.slane %v207, 0
  %v227 = vunpack.c.l.b16 %v190
  %v228 = vunpack.c.l.b16 %v191
  %v229 = vunpack.c.l.b16 %v192
  %v230 = vunpack.c.l.b16 %v193
  %v231 = vunpack.c.l.b16 %v194
  %v232 = vunpack.c.l.b16 %v195
  %v233 = vunpack.c.l.b16 %v196
  %v234 = vunpack.c.l.b16 %v197
  %v235 = vunpack.c.l.b16 %v198
  %v236 = vunpack.c.l.b16 %v199
  %v237 = vunpack.c.l.b16 %v200
  %v238 = vunpack.c.l.b16 %v201
  %v239 = vunpack.c.l.b16 %v202
  %v240 = vunpack.c.l.b16 %v203
  %v241 = vunpack.c.l.b16 %v204
  %v242 = vunpack.c.l.b16 %v205
  %v243 = vpack.c.b16 %v228, %v227
  %v244 = vpack.c.b16 %v230, %v229
  %v245 = vpack.c.b16 %v232, %v231
  %v246 = vpack.c.b16 %v234, %v233
  %v247 = vpack.c.b16 %v236, %v235
  %v248 = vpack.c.b16 %v238, %v237
  %v249 = vpack.c.b16 %v240, %v239
  %v250 = vpack.c.b16 %v242, %v241
  %259 = vmatpush.bf16.msra.mxu0 %v250
  %260 = vmatpush.bf16.msra.mxu0 %v249
  %261 = vmatpush.bf16.msra.mxu0 %v248
  %262 = vmatpush.bf16.msra.mxu0 %v247
  %263 = vmatpush.bf16.msra.mxu0 %v246
  %264 = vmatpush.bf16.msra.mxu0 %v245
  %265 = vmatpush.bf16.msra.mxu0 %v244
  %266 = vmatpush.bf16.msra.mxu0 %v243
  %267 = vmatmul.bf16.gmra.mxu0 %v188
  %v268 = vpop.f32.mrf.mxu0
  %v269 = vadd.f32 %v209, %v268
  %v270 = vpop.f32.mrf.mxu0
  %v271 = vadd.f32 %v209, %v270
  %272 = vdwg.mxu0
  %v273 = vsub.f32 0.0, %v269
  %v274 = vsub.f32 0.0, %v271
  %v275 = vmul.f32 %v273, 1.442695
  %v276 = vpow.pop %v275
  %v277 = vmul.f32 %v274, 1.442695
  %v278 = vpow.pop %v277
  %v279 = vadd.f32 %v276, 1.0
  %v280 = vadd.f32 %v278, 1.0
  %v281 = vrcp.pop %v279
  %v282 = vrcp.pop %v280
  %v283 = vmul.f32 %v269, %v281
  %v284 = vmul.f32 %v271, %v282
  %v285 = vpack.c.bf16 %v284, %v283
  %s286 = scalar_lea.vmem %s3, 128
  %v287 = vld [vmem:[%s286] sm:$0xf]
  %v288 = vld [vmem:[%s286 + $0x4] sm:$0xf]
  %v289 = vld [vmem:[%s286 + $0x8] sm:$0xf]
  %v290 = vld [vmem:[%s286 + $0xc] sm:$0xf]
  %v291 = vld [vmem:[%s286 + $0x10] sm:$0xf]
  %v292 = vld [vmem:[%s286 + $0x14] sm:$0xf]
  %v293 = vld [vmem:[%s286 + $0x18] sm:$0xf]
  %v294 = vld [vmem:[%s286 + $0x1c] sm:$0xf]
  %v295 = vld [vmem:[%s286 + $0x20] sm:$0xf]
  %v296 = vld [vmem:[%s286 + $0x24] sm:$0xf]
  %v297 = vld [vmem:[%s286 + $0x28] sm:$0xf]
  %v298 = vld [vmem:[%s286 + $0x2c] sm:$0xf]
  %v299 = vld [vmem:[%s286 + $0x30] sm:$0xf]
  %v300 = vld [vmem:[%s286 + $0x34] sm:$0xf]
  %v301 = vld [vmem:[%s286 + $0x38] sm:$0xf]
  %v302 = vld [vmem:[%s286 + $0x3c] sm:$0xf]
  %s303 = scalar_lea.vmem %s4, 2
  %v304 = vld [vmem:[%s303] sm:$0x1]
  %v306 = vperm.slane %v304, 0
  %v324 = vunpack.c.l.b16 %v287
  %v325 = vunpack.c.l.b16 %v288
  %v326 = vunpack.c.l.b16 %v289
  %v327 = vunpack.c.l.b16 %v290
  %v328 = vunpack.c.l.b16 %v291
  %v329 = vunpack.c.l.b16 %v292
  %v330 = vunpack.c.l.b16 %v293
  %v331 = vunpack.c.l.b16 %v294
  %v332 = vunpack.c.l.b16 %v295
  %v333 = vunpack.c.l.b16 %v296
  %v334 = vunpack.c.l.b16 %v297
  %v335 = vunpack.c.l.b16 %v298
  %v336 = vunpack.c.l.b16 %v299
  %v337 = vunpack.c.l.b16 %v300
  %v338 = vunpack.c.l.b16 %v301
  %v339 = vunpack.c.l.b16 %v302
  %v340 = vpack.c.b16 %v325, %v324
  %v341 = vpack.c.b16 %v327, %v326
  %v342 = vpack.c.b16 %v329, %v328
  %v343 = vpack.c.b16 %v331, %v330
  %v344 = vpack.c.b16 %v333, %v332
  %v345 = vpack.c.b16 %v335, %v334
  %v346 = vpack.c.b16 %v337, %v336
  %v347 = vpack.c.b16 %v339, %v338
  %356 = vmatpush.bf16.msra.mxu0 %v347
  %357 = vmatpush.bf16.msra.mxu0 %v346
  %358 = vmatpush.bf16.msra.mxu0 %v345
  %359 = vmatpush.bf16.msra.mxu0 %v344
  %360 = vmatpush.bf16.msra.mxu0 %v343
  %361 = vmatpush.bf16.msra.mxu0 %v342
  %362 = vmatpush.bf16.msra.mxu0 %v341
  %363 = vmatpush.bf16.msra.mxu0 %v340
  %364 = vmatmul.bf16.gmra.mxu0 %v285
  %v365 = vpop.f32.mrf.mxu0
  %v366 = vadd.f32 %v306, %v365
  %v367 = vpop.f32.mrf.mxu0
  %v368 = vadd.f32 %v306, %v367
  %369 = vdwg.mxu0
  %v370 = vsub.f32 0.0, %v366
  %v371 = vsub.f32 0.0, %v368
  %v372 = vmul.f32 %v370, 1.442695
  %v373 = vpow.pop %v372
  %v374 = vmul.f32 %v371, 1.442695
  %v375 = vpow.pop %v374
  %v376 = vadd.f32 %v373, 1.0
  %v377 = vadd.f32 %v375, 1.0
  %v378 = vrcp.pop %v376
  %v379 = vrcp.pop %v377
  %v380 = vmul.f32 %v366, %v378
  %v381 = vmul.f32 %v368, %v379
  %v382 = vpack.c.bf16 %v381, %v380
  %s383 = scalar_lea.vmem %s3, 192
  %v384 = vld [vmem:[%s383] sm:$0xf]
  %v385 = vld [vmem:[%s383 + $0x4] sm:$0xf]
  %v386 = vld [vmem:[%s383 + $0x8] sm:$0xf]
  %v387 = vld [vmem:[%s383 + $0xc] sm:$0xf]
  %v388 = vld [vmem:[%s383 + $0x10] sm:$0xf]
  %v389 = vld [vmem:[%s383 + $0x14] sm:$0xf]
  %v390 = vld [vmem:[%s383 + $0x18] sm:$0xf]
  %v391 = vld [vmem:[%s383 + $0x1c] sm:$0xf]
  %v392 = vld [vmem:[%s383 + $0x20] sm:$0xf]
  %v393 = vld [vmem:[%s383 + $0x24] sm:$0xf]
  %v394 = vld [vmem:[%s383 + $0x28] sm:$0xf]
  %v395 = vld [vmem:[%s383 + $0x2c] sm:$0xf]
  %v396 = vld [vmem:[%s383 + $0x30] sm:$0xf]
  %v397 = vld [vmem:[%s383 + $0x34] sm:$0xf]
  %v398 = vld [vmem:[%s383 + $0x38] sm:$0xf]
  %v399 = vld [vmem:[%s383 + $0x3c] sm:$0xf]
  %s400 = scalar_lea.vmem %s4, 3
  %v401 = vld [vmem:[%s400] sm:$0x1]
  %v403 = vperm.slane %v401, 0
  %v421 = vunpack.c.l.b16 %v384
  %v422 = vunpack.c.l.b16 %v385
  %v423 = vunpack.c.l.b16 %v386
  %v424 = vunpack.c.l.b16 %v387
  %v425 = vunpack.c.l.b16 %v388
  %v426 = vunpack.c.l.b16 %v389
  %v427 = vunpack.c.l.b16 %v390
  %v428 = vunpack.c.l.b16 %v391
  %v429 = vunpack.c.l.b16 %v392
  %v430 = vunpack.c.l.b16 %v393
  %v431 = vunpack.c.l.b16 %v394
  %v432 = vunpack.c.l.b16 %v395
  %v433 = vunpack.c.l.b16 %v396
  %v434 = vunpack.c.l.b16 %v397
  %v435 = vunpack.c.l.b16 %v398
  %v436 = vunpack.c.l.b16 %v399
  %v437 = vpack.c.b16 %v422, %v421
  %v438 = vpack.c.b16 %v424, %v423
  %v439 = vpack.c.b16 %v426, %v425
  %v440 = vpack.c.b16 %v428, %v427
  %v441 = vpack.c.b16 %v430, %v429
  %v442 = vpack.c.b16 %v432, %v431
  %v443 = vpack.c.b16 %v434, %v433
  %v444 = vpack.c.b16 %v436, %v435
  %453 = vmatpush.bf16.msra.mxu0 %v444
  %454 = vmatpush.bf16.msra.mxu0 %v443
  %455 = vmatpush.bf16.msra.mxu0 %v442
  %456 = vmatpush.bf16.msra.mxu0 %v441
  %457 = vmatpush.bf16.msra.mxu0 %v440
  %458 = vmatpush.bf16.msra.mxu0 %v439
  %459 = vmatpush.bf16.msra.mxu0 %v438
  %460 = vmatpush.bf16.msra.mxu0 %v437
  %461 = vmatmul.bf16.gmra.mxu0 %v382
  %v462 = vpop.f32.mrf.mxu0
  %v463 = vadd.f32 %v403, %v462
  %v464 = vpop.f32.mrf.mxu0
  %v465 = vadd.f32 %v403, %v464
  %466 = vdwg.mxu0
  %v467 = vsub.f32 0.0, %v463
  %v468 = vsub.f32 0.0, %v465
  %v469 = vmul.f32 %v467, 1.442695
  %v470 = vpow.pop %v469
  %v471 = vmul.f32 %v468, 1.442695
  %v472 = vpow.pop %v471
  %v473 = vadd.f32 %v470, 1.0
  %v474 = vadd.f32 %v472, 1.0
  %v475 = vrcp.pop %v473
  %v476 = vrcp.pop %v474
  %v477 = vmul.f32 %v463, %v475
  %v478 = vmul.f32 %v465, %v476
  %v479 = vpack.c.bf16 %v478, %v477
  %v480 = vld [vmem:[%s5] sm:$0xf]
  %v481 = vld [vmem:[%s5 + $0x4] sm:$0xf]
  %v482 = vld [vmem:[%s5 + $0x8] sm:$0xf]
  %v483 = vld [vmem:[%s5 + $0xc] sm:$0xf]
  %v484 = vld [vmem:[%s5 + $0x10] sm:$0xf]
  %v485 = vld [vmem:[%s5 + $0x14] sm:$0xf]
  %v486 = vld [vmem:[%s5 + $0x18] sm:$0xf]
  %v487 = vld [vmem:[%s5 + $0x1c] sm:$0xf]
  %v488 = vld [vmem:[%s5 + $0x20] sm:$0xf]
  %v489 = vld [vmem:[%s5 + $0x24] sm:$0xf]
  %v490 = vld [vmem:[%s5 + $0x28] sm:$0xf]
  %v491 = vld [vmem:[%s5 + $0x2c] sm:$0xf]
  %v492 = vld [vmem:[%s5 + $0x30] sm:$0xf]
  %v493 = vld [vmem:[%s5 + $0x34] sm:$0xf]
  %v494 = vld [vmem:[%s5 + $0x38] sm:$0xf]
  %v495 = vld [vmem:[%s5 + $0x3c] sm:$0xf]
  %v496 = vld [vmem:[%s6] sm:$0xf]
  %v497 = vld [vmem:[%s6 + $0x4] sm:$0xf]
  %v498 = vld [vmem:[%s6 + $0x8] sm:$0xf]
  %v499 = vld [vmem:[%s6 + $0xc] sm:$0xf]
  %v504 = vunpack.c.l.b16 %v496
  %v505 = vunpack.c.l.b16 %v497
  %v506 = vunpack.c.l.b16 %v498
  %v507 = vunpack.c.l.b16 %v499
  %v508 = vpack.c.b16 %v505, %v504
  %v509 = vpack.c.b16 %v507, %v506
  %512 = vmatpush.bf16.msra.mxu0 0
  %513 = vmatpush.bf16.msra.mxu0 0
  %514 = vmatpush.bf16.msra.mxu0 0
  %515 = vmatpush.bf16.msra.mxu0 0
  %516 = vmatpush.bf16.msra.mxu0 0
  %517 = vmatpush.bf16.msra.mxu0 0
  %518 = vmatpush.bf16.msra.mxu0 %v509
  %519 = vmatpush.bf16.msra.mxu0 %v508
  %520 = vmatmul.bf16.gmra.mxu0 %v65
  %v521 = vpop.f32.mrf.mxu0
  %v522 = vadd.f32 0.0, %v521
  %v523 = vpop.f32.mrf.mxu0
  %v524 = vadd.f32 0.0, %v523
  %525 = vdwg.mxu0
  %v542 = vunpack.c.l.b16 %v480
  %v543 = vunpack.c.l.b16 %v481
  %v544 = vunpack.c.l.b16 %v482
  %v545 = vunpack.c.l.b16 %v483
  %v546 = vunpack.c.l.b16 %v484
  %v547 = vunpack.c.l.b16 %v485
  %v548 = vunpack.c.l.b16 %v486
  %v549 = vunpack.c.l.b16 %v487
  %v550 = vunpack.c.l.b16 %v488
  %v551 = vunpack.c.l.b16 %v489
  %v552 = vunpack.c.l.b16 %v490
  %v553 = vunpack.c.l.b16 %v491
  %v554 = vunpack.c.l.b16 %v492
  %v555 = vunpack.c.l.b16 %v493
  %v556 = vunpack.c.l.b16 %v494
  %v557 = vunpack.c.l.b16 %v495
  %v558 = vpack.c.b16 %v543, %v542
  %v559 = vpack.c.b16 %v545, %v544
  %v560 = vpack.c.b16 %v547, %v546
  %v561 = vpack.c.b16 %v549, %v548
  %v562 = vpack.c.b16 %v551, %v550
  %v563 = vpack.c.b16 %v553, %v552
  %v564 = vpack.c.b16 %v555, %v554
  %v565 = vpack.c.b16 %v557, %v556
  %574 = vmatpush.bf16.msra.mxu0 %v565
  %575 = vmatpush.bf16.msra.mxu0 %v564
  %576 = vmatpush.bf16.msra.mxu0 %v563
  %577 = vmatpush.bf16.msra.mxu0 %v562
  %578 = vmatpush.bf16.msra.mxu0 %v561
  %579 = vmatpush.bf16.msra.mxu0 %v560
  %580 = vmatpush.bf16.msra.mxu0 %v559
  %581 = vmatpush.bf16.msra.mxu0 %v558
  %582 = vmatmul.bf16.gmra.mxu0 %v479
  %v583 = vpop.f32.mrf.mxu0
  %v584 = vadd.f32 %v522, %v583
  %v585 = vpop.f32.mrf.mxu0
  %v586 = vadd.f32 %v524, %v585
  %587 = vdwg.mxu0
  %v588 = vld [vmem:[%s7] sm:$0x1]
  %v590 = vperm.slane %v588, 0
  %v592 = vadd.f32 %v584, %v590
  %v593 = vadd.f32 %v586, %v590
  %v594 = vsub.f32 0.0, %v592
  %v595 = vsub.f32 0.0, %v593
  %v596 = vmul.f32 %v594, 1.442695
  %v597 = vpow.pop %v596
  %v598 = vmul.f32 %v595, 1.442695
  %v599 = vpow.pop %v598
  %v600 = vadd.f32 %v597, 1.0
  %v601 = vadd.f32 %v599, 1.0
  %v602 = vrcp.pop %v600
  %v603 = vrcp.pop %v601
  %v604 = vmul.f32 %v592, %v602
  %v605 = vmul.f32 %v593, %v603
  %v606 = vpack.c.bf16 %v605, %v604
  %v607 = vld [vmem:[%s8] sm:$0xf]
  %v608 = vld [vmem:[%s8 + $0x4] sm:$0xf]
  %v609 = vld [vmem:[%s8 + $0x8] sm:$0xf]
  %v610 = vld [vmem:[%s8 + $0xc] sm:$0xf]
  %v611 = vld [vmem:[%s8 + $0x10] sm:$0xf]
  %v612 = vld [vmem:[%s8 + $0x14] sm:$0xf]
  %v613 = vld [vmem:[%s8 + $0x18] sm:$0xf]
  %v614 = vld [vmem:[%s8 + $0x1c] sm:$0xf]
  %v615 = vld [vmem:[%s8 + $0x20] sm:$0xf]
  %v616 = vld [vmem:[%s8 + $0x24] sm:$0xf]
  %v617 = vld [vmem:[%s8 + $0x28] sm:$0xf]
  %v618 = vld [vmem:[%s8 + $0x2c] sm:$0xf]
  %v619 = vld [vmem:[%s8 + $0x30] sm:$0xf]
  %v620 = vld [vmem:[%s8 + $0x34] sm:$0xf]
  %v621 = vld [vmem:[%s8 + $0x38] sm:$0xf]
  %v622 = vld [vmem:[%s8 + $0x3c] sm:$0xf]
  %v623 = vld [vmem:[%s9] sm:$0x1]
  %v625 = vperm.slane %v623, 0
  %v643 = vunpack.c.l.b16 %v607
  %v644 = vunpack.c.l.b16 %v608
  %v645 = vunpack.c.l.b16 %v609
  %v646 = vunpack.c.l.b16 %v610
  %v647 = vunpack.c.l.b16 %v611
  %v648 = vunpack.c.l.b16 %v612
  %v649 = vunpack.c.l.b16 %v613
  %v650 = vunpack.c.l.b16 %v614
  %v651 = vunpack.c.l.b16 %v615
  %v652 = vunpack.c.l.b16 %v616
  %v653 = vunpack.c.l.b16 %v617
  %v654 = vunpack.c.l.b16 %v618
  %v655 = vunpack.c.l.b16 %v619
  %v656 = vunpack.c.l.b16 %v620
  %v657 = vunpack.c.l.b16 %v621
  %v658 = vunpack.c.l.b16 %v622
  %v659 = vpack.c.b16 %v644, %v643
  %v660 = vpack.c.b16 %v646, %v645
  %v661 = vpack.c.b16 %v648, %v647
  %v662 = vpack.c.b16 %v650, %v649
  %v663 = vpack.c.b16 %v652, %v651
  %v664 = vpack.c.b16 %v654, %v653
  %v665 = vpack.c.b16 %v656, %v655
  %v666 = vpack.c.b16 %v658, %v657
  %675 = vmatpush.bf16.msra.mxu0 %v666
  %676 = vmatpush.bf16.msra.mxu0 %v665
  %677 = vmatpush.bf16.msra.mxu0 %v664
  %678 = vmatpush.bf16.msra.mxu0 %v663
  %679 = vmatpush.bf16.msra.mxu0 %v662
  %680 = vmatpush.bf16.msra.mxu0 %v661
  %681 = vmatpush.bf16.msra.mxu0 %v660
  %682 = vmatpush.bf16.msra.mxu0 %v659
  %683 = vmatmul.bf16.gmra.mxu0 %v606
  %v684 = vpop.f32.mrf.mxu0
  %v685 = vadd.f32 %v625, %v684
  %v686 = vpop.f32.mrf.mxu0
  %v687 = vadd.f32 %v625, %v686
  %688 = vdwg.mxu0
  %vm689 = vcmask 64512
  %690 = vst.msk [vmem:[%s10] sm:$0xff] %vm689, %v685
  %691 = vst.msk [vmem:[%s10 + $0x8] sm:$0xff] %vm689, %v687
  // Predicated region
  $region42: #{net_forward.1} parent=0 // pred_check
    _
  $region43: #{net_forward.1} parent=0 // pred_check_branch
    %693 = sbr.rel (0) target = $region45
  $region44: #{net_forward.1} parent=0 // pred_region
    _
  $region45: #{net_forward.1} parent=0 // pred_fallthru
    _
  // Predicated region
  $region46: #{net_forward.1} parent=0 // pred_check
    _
  $region47: #{net_forward.1} parent=0 // pred_check_branch
    %695 = sbr.rel (0) target = $region49
  $region48: #{net_forward.1} parent=0 // pred_region
    _
  $region49: #{net_forward.1} parent=0 // pred_fallthru
    _

</llo_original>
